<compile_context>
chip_gen: v7x
topology: tpu7x:2x2x1
jax: 0.10.0
libtpu: 0.0.40
codegen_flags: <defaults>
</compile_context>

<pallas_src>
import jax
import jax.numpy as jnp
from jax.experimental import pallas as pl
from jax.experimental.pallas import tpu as pltpu

IN_DIM = 512
HID_DIM = 50
HID_PAD = 64          # lane-friendly padded hidden width (zeros in the pad)
OUT_DIM = 1

_LANE = 128
_SPLIT_THRESHOLD = 256   # above this, force >=2 grid steps (v7x megacore)


def _mlp_kernel(x_ref, w1_ref, b1_ref, w2_ref, b2_ref, o_ref):
    # fc1 on the MXU, f32 accumulation. Narrow (bf16) activations are promoted
    # in-register (the HBM read was already narrow); w1 stays f32 for accuracy.
    x = x_ref[...]
    if x.dtype != jnp.float32:
        x = x.astype(jnp.float32)
    h = jnp.dot(x, w1_ref[...], preferred_element_type=jnp.float32)
    h = jnp.maximum(h + b1_ref[...], 0.0)            # bias + ReLU, (tile, HID_PAD)

    # TODO(synk): F.dropout(training=self.training) is identity at inference;
    # training-mode stochastic dropout would use pltpu.prng_seed/prng_random_bits.

    # fc2 (K=50->64, N=1) as a VPU multiply + XLU lane reduction (no low-occupancy
    # MXU pass). w2_ref is the fc2 weight as a zero-padded (1, HID_PAD) row.
    y = jnp.sum(h * w2_ref[...], axis=-1, keepdims=True) + b2_ref[...]   # (tile, 1)

    # Lane-dense store: transpose to (1, tile) so writeback is a contiguous,
    # unmasked slab rather than a 1-lane strided store per row.
    o_ref[...] = jax.nn.sigmoid(jnp.transpose(y)).astype(o_ref.dtype)


def _pad_axis(arr, target, axis):
    pad = target - arr.shape[axis]
    if pad <= 0:
        return arr
    widths = [(0, 0)] * arr.ndim
    widths[axis] = (0, pad)
    return jnp.pad(arr, widths)


def prepare_params(w1, b1, w2, b2):
    """One-time parameter prep (hoisted out of the forward path).

    Pads the hidden dim 50 -> 64 with zeros (numerically inert: b1 pad = 0 so
    ReLU keeps it 0, and w2 pad = 0 contributes nothing to the fc2 reduction)
    and lays the fc2 weight out as a (1, 64) row.
    """
    w1p = _pad_axis(jnp.asarray(w1, jnp.float32), HID_PAD, 1)                    # (512, 64)
    b1p = _pad_axis(jnp.asarray(b1, jnp.float32).reshape(1, -1), HID_PAD, 1)     # (1, 64)
    w2r = _pad_axis(jnp.asarray(w2, jnp.float32).reshape(1, -1), HID_PAD, 1)     # (1, 64)
    b2p = jnp.asarray(b2, jnp.float32).reshape(1, OUT_DIM)                       # (1, 1)
    return w1p, b1p, w2r, b2p


def _round_up(v, m):
    return ((v + m - 1) // m) * m


def _pick_tile(B, batch_tile):
    if B <= _SPLIT_THRESHOLD:
        # Single grid step whose block exactly covers the batch: no padding,
        # no clipped rows, no masked stores.
        return B, 1
    # Multi-step grid: tiles are multiples of 128 so the lane-dense (1, tile)
    # output blocks stay (8,128)-legal, and capped at ~B/2 so the "parallel"
    # batch axis always has >=2 steps (v7x shards them across both TensorCores).
    tile = min(_round_up(batch_tile, _LANE), _round_up(pl.cdiv(B, 2), _LANE))
    tile = max(tile, _LANE)
    return tile, pl.cdiv(B, tile)


def vgg10_dis_forward(x, params, *, batch_tile=1024):
    """x: [B, 512] (f32 or bf16, as produced upstream) -> [B, 1] sigmoid probs.

    `params` is the tuple returned by prepare_params(). No copy/cast of x is
    made here: the kernel streams x straight from HBM.
    """
    w1p, b1p, w2r, b2p = params
    B, D = x.shape
    assert D == IN_DIM

    tile, num_tiles = _pick_tile(B, batch_tile)

    out = pl.pallas_call(
        _mlp_kernel,
        out_shape=jax.ShapeDtypeStruct((1, num_tiles * tile), jnp.float32),
        grid_spec=pl.GridSpec(
            grid=(num_tiles,),
            in_specs=[
                pl.BlockSpec((tile, IN_DIM), lambda i: (i, 0)),      # x tile (last block clipped)
                pl.BlockSpec((IN_DIM, HID_PAD), lambda i: (0, 0)),   # W1 (VMEM-resident)
                pl.BlockSpec((1, HID_PAD), lambda i: (0, 0)),        # b1
                pl.BlockSpec((1, HID_PAD), lambda i: (0, 0)),        # w2 row
                pl.BlockSpec((1, OUT_DIM), lambda i: (0, 0)),        # b2
            ],
            out_specs=pl.BlockSpec((1, tile), lambda i: (0, i)),     # lane-dense slab
        ),
        compiler_params=pltpu.CompilerParams(
            dimension_semantics=("parallel",),
        ),
    )(x, w1p, b1p, w2r, b2p)

    # Cheap wrapper-side layout fixup: (1, num_tiles*tile) -> (B, 1).
    return out.reshape(-1)[:B].reshape(B, OUT_DIM)


def _reference_forward(x, w1, b1, w2, b2):
    h = jnp.maximum(x.astype(jnp.float32) @ w1 + b1.reshape(1, -1), 0.0)
    return jax.nn.sigmoid(h @ w2 + b2.reshape(1, -1))


if __name__ == "__main__":
    key = jax.random.PRNGKey(0)
    k_x, k_w1, k_b1, k_w2, k_b2 = jax.random.split(key, 5)

    # Deterministic synthetic parameters (PyTorch-style uniform fan-in init).
    bound1 = 1.0 / (IN_DIM ** 0.5)
    bound2 = 1.0 / (HID_DIM ** 0.5)
    w1 = jax.random.uniform(k_w1, (IN_DIM, HID_DIM), jnp.float32, -bound1, bound1)
    b1 = jax.random.uniform(k_b1, (HID_DIM,), jnp.float32, -bound1, bound1)
    w2 = jax.random.uniform(k_w2, (HID_DIM, OUT_DIM), jnp.float32, -bound2, bound2)
    b2 = jax.random.uniform(k_b2, (OUT_DIM,), jnp.float32, -bound2, bound2)

    params = prepare_params(w1, b1, w2, b2)   # one-time prep, reused across calls

    # --- small batch: single grid step, block == full array (no padding) ------
    B_small = 16
    x_small = jax.random.normal(k_x, (B_small, IN_DIM), jnp.float32)
    ref_small = _reference_forward(x_small, w1, b1, w2, b2)
    out_small = jax.block_until_ready(vgg10_dis_forward(x_small, params))
    assert out_small.shape == (B_small, OUT_DIM)
    assert jnp.allclose(out_small, ref_small, atol=1e-5, rtol=1e-5), \
        "small-batch f32 mismatch vs reference"

    # --- ragged larger batch: multi-step grid, 128-aligned tiles, clipped tail,
    #     >=2 parallel steps (v7x megacore path) -------------------------------
    B_big = 300
    x_big = jax.random.normal(jax.random.PRNGKey(1), (B_big, IN_DIM), jnp.float32)
    ref_big = _reference_forward(x_big, w1, b1, w2, b2)
    out_big = jax.block_until_ready(vgg10_dis_forward(x_big, params))
    assert out_big.shape == (B_big, OUT_DIM)
    assert jnp.allclose(out_big, ref_big, atol=1e-5, rtol=1e-5), \
        "ragged-batch f32 mismatch vs reference"

    # --- bf16 activations produced upstream (no wrapper cast in forward path) --
    out_bf16 = jax.block_until_ready(
        vgg10_dis_forward(x_big.astype(jnp.bfloat16), params))
    assert out_bf16.shape == (B_big, OUT_DIM)
    assert jnp.allclose(out_bf16, ref_big, atol=5e-2), "bf16 mismatch vs reference"

    print("KERNEL_OK")
</pallas_src>

<mosaic_0001>
module attributes {stable_mosaic.version = 11 : i64} {
  func.func @_mlp_kernel(%arg0: i32, %arg1: memref<16x512xf32, #tpu.memory_space<vmem>>, %arg2: memref<512x64xf32, #tpu.memory_space<vmem>>, %arg3: memref<1x64xf32, #tpu.memory_space<vmem>>, %arg4: memref<1x64xf32, #tpu.memory_space<vmem>>, %arg5: memref<1x1xf32, #tpu.memory_space<vmem>>, %arg6: memref<1x16xf32, #tpu.memory_space<vmem>>) attributes {dimension_semantics = [#tpu.dimension_semantics<parallel>], iteration_bounds = array<i64: 1>, scalar_prefetch = 0 : i64, scratch_operands = 0 : i64, tpu.core_type = #tpu.core_type<tc>, window_params = [{transform_indices = @transform_0, window_bounds = array<i64: 16, 512>}, {pipeline_mode = #tpu.pipeline_mode<synchronous>, transform_indices = @transform_1, window_bounds = array<i64: 512, 64>}, {pipeline_mode = #tpu.pipeline_mode<synchronous>, transform_indices = @transform_2, window_bounds = array<i64: 1, 64>}, {pipeline_mode = #tpu.pipeline_mode<synchronous>, transform_indices = @transform_3, window_bounds = array<i64: 1, 64>}, {pipeline_mode = #tpu.pipeline_mode<synchronous>, transform_indices = @transform_4, window_bounds = array<i64: 1, 1>}, {transform_indices = @transform_5, window_bounds = array<i64: 1, 16>}]} {
    %c0 = arith.constant 0 : index
    %c0_0 = arith.constant 0 : index
    %0 = vector.load %arg1[%c0, %c0_0] : memref<16x512xf32, #tpu.memory_space<vmem>>, vector<16x512xf32>
    %c0_1 = arith.constant 0 : index
    %c0_2 = arith.constant 0 : index
    %1 = vector.load %arg2[%c0_1, %c0_2] : memref<512x64xf32, #tpu.memory_space<vmem>>, vector<512x64xf32>
    %cst = arith.constant dense<0.000000e+00> : vector<16x64xf32>
    %2 = tpu.matmul %0, %1, %cst {dimension_numbers = #tpu.dot_dimension_numbers<[1], [0], [0], [1], [0, 0, 1, 1], [], []>} : vector<16x512xf32>, vector<512x64xf32>, vector<16x64xf32> -> vector<16x64xf32>
    %c0_3 = arith.constant 0 : index
    %c0_4 = arith.constant 0 : index
    %3 = vector.load %arg3[%c0_3, %c0_4] : memref<1x64xf32, #tpu.memory_space<vmem>>, vector<1x64xf32>
    %4 = vector.broadcast %3 : vector<1x64xf32> to vector<16x64xf32>
    %5 = arith.addf %2, %4 : vector<16x64xf32>
    %cst_5 = arith.constant 0.000000e+00 : f32
    %6 = vector.broadcast %cst_5 : f32 to vector<16x64xf32>
    %7 = arith.maximumf %5, %6 : vector<16x64xf32>
    %c0_6 = arith.constant 0 : index
    %c0_7 = arith.constant 0 : index
    %8 = vector.load %arg4[%c0_6, %c0_7] : memref<1x64xf32, #tpu.memory_space<vmem>>, vector<1x64xf32>
    %9 = vector.broadcast %8 : vector<1x64xf32> to vector<16x64xf32>
    %10 = arith.mulf %7, %9 : vector<16x64xf32>
    %cst_8 = arith.constant dense<0.000000e+00> : vector<16xf32>
    %11 = vector.multi_reduction <add>, %10, %cst_8 [1] : vector<16x64xf32> to vector<16xf32>
    %12 = vector.shape_cast %11 : vector<16xf32> to vector<16x1xf32>
    %c0_9 = arith.constant 0 : index
    %c0_10 = arith.constant 0 : index
    %13 = vector.load %arg5[%c0_9, %c0_10] : memref<1x1xf32, #tpu.memory_space<vmem>>, vector<1x1xf32>
    %14 = vector.broadcast %13 : vector<1x1xf32> to vector<16x1xf32>
    %15 = arith.addf %12, %14 : vector<16x1xf32>
    %16 = tpu.transpose %15, [1, 0] : vector<16x1xf32> -> vector<1x16xf32>
    %17 = arith.negf %16 : vector<1x16xf32>
    %18 = math.exp %17 : vector<1x16xf32>
    %cst_11 = arith.constant 1.000000e+00 : f32
    %19 = vector.broadcast %cst_11 : f32 to vector<1x16xf32>
    %20 = arith.addf %19, %18 : vector<1x16xf32>
    %21 = arith.divf %19, %20 : vector<1x16xf32>
    %c0_12 = arith.constant 0 : index
    %c0_13 = arith.constant 0 : index
    %22 = vector.load %arg6[%c0_12, %c0_13] : memref<1x16xf32, #tpu.memory_space<vmem>>, vector<1x16xf32>
    tpu.vector_store %arg6[%c0_12, %c0_13], %21 {strides = array<i32>} : memref<1x16xf32, #tpu.memory_space<vmem>>, vector<1x16xf32>,
    return
  }
  func.func @transform_0(%arg0: i32) -> (i32, i32) {
    %c0_i32 = arith.constant 0 : i32
    %c0_i32_0 = arith.constant 0 : i32
    return %arg0, %c0_i32 : i32, i32
  }
  func.func @transform_1(%arg0: i32) -> (i32, i32) {
    %c0_i32 = arith.constant 0 : i32
    %c0_i32_0 = arith.constant 0 : i32
    %c0_i32_1 = arith.constant 0 : i32
    return %c0_i32, %c0_i32_0 : i32, i32
  }
  func.func @transform_2(%arg0: i32) -> (i32, i32) {
    %c0_i32 = arith.constant 0 : i32
    %c0_i32_0 = arith.constant 0 : i32
    %c0_i32_1 = arith.constant 0 : i32
    return %c0_i32, %c0_i32_0 : i32, i32
  }
  func.func @transform_3(%arg0: i32) -> (i32, i32) {
    %c0_i32 = arith.constant 0 : i32
    %c0_i32_0 = arith.constant 0 : i32
    %c0_i32_1 = arith.constant 0 : i32
    return %c0_i32, %c0_i32_0 : i32, i32
  }
  func.func @transform_4(%arg0: i32) -> (i32, i32) {
    %c0_i32 = arith.constant 0 : i32
    %c0_i32_0 = arith.constant 0 : i32
    %c0_i32_1 = arith.constant 0 : i32
    return %c0_i32, %c0_i32_0 : i32, i32
  }
  func.func @transform_5(%arg0: i32) -> (i32, i32) {
    %c0_i32 = arith.constant 0 : i32
    %c0_i32_0 = arith.constant 0 : i32
    return %c0_i32, %arg0 : i32, i32
  }
}

</mosaic_0001>

<llo_original>
// kernel: tpu_custom_call.1
$region0: #{tpu_custom_call.1}
  #allocation0 [shape = 'u32[]', space=smem, size = 0x4, offset = 0x4, fixed_abs, tag = 'smem constant byte address 0x4 - core index']
  #allocation1 [shape = 'u32[144,128]{1,0:T(1,128)}', space=vmem, size = 0x12000, scoped, tag = 'internal scratch']
  #allocation2 [shape = 'f32[1,1]{1,0:T(1,128)S(1)}', space=vmem, size = 0x200, scoped, tag = 'scoped memory for tpu_custom_call.1']
  %s0 = inlined_call_operand.vmem [shape: f32[16,512], index: 0, kind: input, shape index: {}]
  %s1 = inlined_call_operand.vmem [shape: f32[512,64], index: 1, kind: input, shape index: {}]
  %s2 = inlined_call_operand.vmem [shape: f32[1,64], index: 2, kind: input, shape index: {}]
  %s3 = inlined_call_operand.vmem [shape: f32[1,64], index: 3, kind: input, shape index: {}]
  %s4 = inlined_call_operand.<no memory space> [shape: f32[1,1], index: 4, kind: input, shape index: {}]
  %s5 = inlined_call_operand.hbm [shape: f32[1,16], index: 5, kind: output, shape index: {}]
  %s6 = sld [smem:[#allocation0]]
  $region30: #{tpu_custom_call.1} parent=0
    _
  %s8 = ssub.s32 1, %s6
  %s9 = scalar_select 0, %s8, %s6
  %v10 = vstv %s4
  %11 = vst [vmem:[#allocation2] sm:$0x1] %v10
  $region1: #{tpu_custom_call.1} parent=0
    #allocation3 [shape = 'u8[512]{0}', space=vmem, size = 0x400, scoped, tag = 'output window, operand 0, single buffered']
    #allocation4 [shape = 's32[1]{0}', space=sflag, size = 0x4, scoped, tag = 'scoped memory for tpu_custom_call.1']
    %12 = vsyncpa [#allocation4], 0
    // Predicated region
    $region2: #{tpu_custom_call.1} parent=1 // pred_check
      _
    $region3: #{tpu_custom_call.1} parent=1 // pred_check_branch
      %14 = sbr.rel (0) target = $region5
    $region4: #{tpu_custom_call.1} parent=1 // pred_region
      _
    $region5: #{tpu_custom_call.1} parent=1 // pred_fallthru
      _
    // Predicated region
    $region6: #{tpu_custom_call.1} parent=1 // pred_check
      _
    $region7: #{tpu_custom_call.1} parent=1 // pred_check_branch
      %16 = sbr.rel (0) target = $region9
    $region8: #{tpu_custom_call.1} parent=1 // pred_region
      _
    $region9: #{tpu_custom_call.1} parent=1 // pred_fallthru
      _
    // Predicated region
    $region10: #{tpu_custom_call.1} parent=1 // pred_check
      _
    $region11: #{tpu_custom_call.1} parent=1 // pred_check_branch
      %18 = sbr.rel (0) target = $region13
    $region12: #{tpu_custom_call.1} parent=1 // pred_region
      _
    $region13: #{tpu_custom_call.1} parent=1 // pred_fallthru
      _
    // Predicated region
    $region14: #{tpu_custom_call.1} parent=1 // pred_check
      _
    $region15: #{tpu_custom_call.1} parent=1 // pred_check_branch
      %20 = sbr.rel (0) target = $region17
    $region16: #{tpu_custom_call.1} parent=1 // pred_region
      _
    $region17: #{tpu_custom_call.1} parent=1 // pred_fallthru
      _
    // Predicated region
    $region18: #{tpu_custom_call.1} parent=1 // pred_check
      _
    $region19: #{tpu_custom_call.1} parent=1 // pred_check_branch
      %22 = sbr.rel (0) target = $region21
    $region20: #{tpu_custom_call.1} parent=1 // pred_region
      _
    $region21: #{tpu_custom_call.1} parent=1 // pred_fallthru
      _
    %v23 = vld [vmem:[%s0] sm:$0xff]
    %v24 = vld [vmem:[%s0 + $0x8] sm:$0xff]
    %v25 = vld [vmem:[%s0 + $0x10] sm:$0xff]
    %v26 = vld [vmem:[%s0 + $0x18] sm:$0xff]
    %v27 = vld [vmem:[%s0 + $0x20] sm:$0xff]
    %v28 = vld [vmem:[%s0 + $0x28] sm:$0xff]
    %v29 = vld [vmem:[%s0 + $0x30] sm:$0xff]
    %v30 = vld [vmem:[%s0 + $0x38] sm:$0xff]
    %v31 = vld [vmem:[%s1] sm:$0xff]
    %v32 = vld [vmem:[%s1 + $0x8] sm:$0xff]
    %v33 = vld [vmem:[%s1 + $0x10] sm:$0xff]
    %v34 = vld [vmem:[%s1 + $0x18] sm:$0xff]
    %v35 = vld [vmem:[%s1 + $0x20] sm:$0xff]
    %v36 = vld [vmem:[%s1 + $0x28] sm:$0xff]
    %v37 = vld [vmem:[%s1 + $0x30] sm:$0xff]
    %v38 = vld [vmem:[%s1 + $0x38] sm:$0xff]
    %v39 = vld [vmem:[%s1 + $0x40] sm:$0xff]
    %v40 = vld [vmem:[%s1 + $0x48] sm:$0xff]
    %v41 = vld [vmem:[%s1 + $0x50] sm:$0xff]
    %v42 = vld [vmem:[%s1 + $0x58] sm:$0xff]
    %v43 = vld [vmem:[%s1 + $0x60] sm:$0xff]
    %v44 = vld [vmem:[%s1 + $0x68] sm:$0xff]
    %v45 = vld [vmem:[%s1 + $0x70] sm:$0xff]
    %v46 = vld [vmem:[%s1 + $0x78] sm:$0xff]
    %v47 = vld [vmem:[%s1 + $0x80] sm:$0xff]
    %v48 = vld [vmem:[%s1 + $0x88] sm:$0xff]
    %v49 = vld [vmem:[%s1 + $0x90] sm:$0xff]
    %v50 = vld [vmem:[%s1 + $0x98] sm:$0xff]
    %v51 = vld [vmem:[%s1 + $0xa0] sm:$0xff]
    %v52 = vld [vmem:[%s1 + $0xa8] sm:$0xff]
    %v53 = vld [vmem:[%s1 + $0xb0] sm:$0xff]
    %v54 = vld [vmem:[%s1 + $0xb8] sm:$0xff]
    %v55 = vld [vmem:[%s1 + $0xc0] sm:$0xff]
    %v56 = vld [vmem:[%s1 + $0xc8] sm:$0xff]
    %v57 = vld [vmem:[%s1 + $0xd0] sm:$0xff]
    %v58 = vld [vmem:[%s1 + $0xd8] sm:$0xff]
    %v59 = vld [vmem:[%s1 + $0xe0] sm:$0xff]
    %v60 = vld [vmem:[%s1 + $0xe8] sm:$0xff]
    %v61 = vld [vmem:[%s1 + $0xf0] sm:$0xff]
    %v62 = vld [vmem:[%s1 + $0xf8] sm:$0xff]
    %v63 = vld [vmem:[%s1 + $0x100] sm:$0xff]
    %v64 = vld [vmem:[%s1 + $0x108] sm:$0xff]
    %v65 = vld [vmem:[%s1 + $0x110] sm:$0xff]
    %v66 = vld [vmem:[%s1 + $0x118] sm:$0xff]
    %v67 = vld [vmem:[%s1 + $0x120] sm:$0xff]
    %v68 = vld [vmem:[%s1 + $0x128] sm:$0xff]
    %v69 = vld [vmem:[%s1 + $0x130] sm:$0xff]
    %v70 = vld [vmem:[%s1 + $0x138] sm:$0xff]
    %v71 = vld [vmem:[%s1 + $0x140] sm:$0xff]
    %v72 = vld [vmem:[%s1 + $0x148] sm:$0xff]
    %v73 = vld [vmem:[%s1 + $0x150] sm:$0xff]
    %v74 = vld [vmem:[%s1 + $0x158] sm:$0xff]
    %v75 = vld [vmem:[%s1 + $0x160] sm:$0xff]
    %v76 = vld [vmem:[%s1 + $0x168] sm:$0xff]
    %v77 = vld [vmem:[%s1 + $0x170] sm:$0xff]
    %v78 = vld [vmem:[%s1 + $0x178] sm:$0xff]
    %v79 = vld [vmem:[%s1 + $0x180] sm:$0xff]
    %v80 = vld [vmem:[%s1 + $0x188] sm:$0xff]
    %v81 = vld [vmem:[%s1 + $0x190] sm:$0xff]
    %v82 = vld [vmem:[%s1 + $0x198] sm:$0xff]
    %v83 = vld [vmem:[%s1 + $0x1a0] sm:$0xff]
    %v84 = vld [vmem:[%s1 + $0x1a8] sm:$0xff]
    %v85 = vld [vmem:[%s1 + $0x1b0] sm:$0xff]
    %v86 = vld [vmem:[%s1 + $0x1b8] sm:$0xff]
    %v87 = vld [vmem:[%s1 + $0x1c0] sm:$0xff]
    %v88 = vld [vmem:[%s1 + $0x1c8] sm:$0xff]
    %v89 = vld [vmem:[%s1 + $0x1d0] sm:$0xff]
    %v90 = vld [vmem:[%s1 + $0x1d8] sm:$0xff]
    %v91 = vld [vmem:[%s1 + $0x1e0] sm:$0xff]
    %v92 = vld [vmem:[%s1 + $0x1e8] sm:$0xff]
    %v93 = vld [vmem:[%s1 + $0x1f0] sm:$0xff]
    %v94 = vld [vmem:[%s1 + $0x1f8] sm:$0xff]
    %v95 = vld [vmem:[%s2] sm:$0x1]
    %v97 = vlaneseq
    %v98 = vshrl.u32 %v97, 7
    %v99 = vsub.s32 0, %v98
    %v100 = vrot.slane %v95, %v99
    %102 = vmatprep.subr.mxu0 0.0
    %103 = vmatpush1.msra.mxu0 %v31
    %104 = vmatprep.subr.mxu0 0.0
    %105 = vmatpush1.msra.mxu0 %v32
    %106 = vmatprep.subr.mxu0 0.0
    %107 = vmatpush1.msra.mxu0 %v33
    %108 = vmatprep.subr.mxu0 0.0
    %109 = vmatpush1.msra.mxu0 %v34
    %110 = vmatprep.subr.mxu0 0.0
    %111 = vmatpush1.msra.mxu0 %v35
    %112 = vmatprep.subr.mxu0 0.0
    %113 = vmatpush1.msra.mxu0 %v36
    %114 = vmatprep.subr.mxu0 0.0
    %115 = vmatpush1.msra.mxu0 %v37
    %116 = vmatprep.subr.mxu0 0.0
    %117 = vmatpush1.msra.mxu0 %v38
    %118 = vmatprep.subr.mxu0 0.0
    %119 = vmatpush1.msra.mxu0 %v39
    %120 = vmatprep.subr.mxu0 0.0
    %121 = vmatpush1.msra.mxu0 %v40
    %122 = vmatprep.subr.mxu0 0.0
    %123 = vmatpush1.msra.mxu0 %v41
    %124 = vmatprep.subr.mxu0 0.0
    %125 = vmatpush1.msra.mxu0 %v42
    %126 = vmatprep.subr.mxu0 0.0
    %127 = vmatpush1.msra.mxu0 %v43
    %128 = vmatprep.subr.mxu0 0.0
    %129 = vmatpush1.msra.mxu0 %v44
    %130 = vmatprep.subr.mxu0 0.0
    %131 = vmatpush1.msra.mxu0 %v45
    %132 = vmatprep.subr.mxu0 0.0
    %133 = vmatpush1.msra.mxu0 %v46
    %134 = vmatprep.subr.mxu0 0.0
    %135 = vmatpush1.msra.mxu0 %v47
    %136 = vmatprep.subr.mxu0 0.0
    %137 = vmatpush1.msra.mxu0 %v48
    %138 = vmatprep.subr.mxu0 0.0
    %139 = vmatpush1.msra.mxu0 %v49
    %140 = vmatprep.subr.mxu0 0.0
    %141 = vmatpush1.msra.mxu0 %v50
    %142 = vmatprep.subr.mxu0 0.0
    %143 = vmatpush1.msra.mxu0 %v51
    %144 = vmatprep.subr.mxu0 0.0
    %145 = vmatpush1.msra.mxu0 %v52
    %146 = vmatprep.subr.mxu0 0.0
    %147 = vmatpush1.msra.mxu0 %v53
    %148 = vmatprep.subr.mxu0 0.0
    %149 = vmatpush1.msra.mxu0 %v54
    %150 = vmatprep.subr.mxu0 0.0
    %151 = vmatpush1.msra.mxu0 %v55
    %152 = vmatprep.subr.mxu0 0.0
    %153 = vmatpush1.msra.mxu0 %v56
    %154 = vmatprep.subr.mxu0 0.0
    %155 = vmatpush1.msra.mxu0 %v57
    %156 = vmatprep.subr.mxu0 0.0
    %157 = vmatpush1.msra.mxu0 %v58
    %158 = vmatprep.subr.mxu0 0.0
    %159 = vmatpush1.msra.mxu0 %v59
    %160 = vmatprep.subr.mxu0 0.0
    %161 = vmatpush1.msra.mxu0 %v60
    %162 = vmatprep.subr.mxu0 0.0
    %163 = vmatpush1.msra.mxu0 %v61
    %164 = vmatprep.subr.mxu0 0.0
    %165 = vmatpush1.msra.mxu0 %v62
    %166 = vmatprep.mubr.f32.mxu0 %v24
    %167 = vmatmul.mubr.f32.gmra.mrb[0].mxu0 %v23
    %v168 = vpop.f32.mrb[0].mxu0
    %v169 = vadd.f32 %v100, %v168
    %v170 = vpop.f32.mrb[0].mxu0
    %171 = vmatprep.mubr.f32.mxu0 %v28
    %172 = vmatmul.mubr.f32.gmra.mrb[0].mxu0 %v27
    %v173 = vpop.f32.mrb[0].mxu0
    %v174 = vadd.f32 %v100, %v173
    %v175 = vpop.f32.mrb[0].mxu0
    %176 = vdwg.mxu0
    %177 = vmatprep.subr.mxu0 0.0
    %178 = vmatpush1.msra.mxu0 %v63
    %179 = vmatprep.subr.mxu0 0.0
    %180 = vmatpush1.msra.mxu0 %v64
    %181 = vmatprep.subr.mxu0 0.0
    %182 = vmatpush1.msra.mxu0 %v65
    %183 = vmatprep.subr.mxu0 0.0
    %184 = vmatpush1.msra.mxu0 %v66
    %185 = vmatprep.subr.mxu0 0.0
    %186 = vmatpush1.msra.mxu0 %v67
    %187 = vmatprep.subr.mxu0 0.0
    %188 = vmatpush1.msra.mxu0 %v68
    %189 = vmatprep.subr.mxu0 0.0
    %190 = vmatpush1.msra.mxu0 %v69
    %191 = vmatprep.subr.mxu0 0.0
    %192 = vmatpush1.msra.mxu0 %v70
    %193 = vmatprep.subr.mxu0 0.0
    %194 = vmatpush1.msra.mxu0 %v71
    %195 = vmatprep.subr.mxu0 0.0
    %196 = vmatpush1.msra.mxu0 %v72
    %197 = vmatprep.subr.mxu0 0.0
    %198 = vmatpush1.msra.mxu0 %v73
    %199 = vmatprep.subr.mxu0 0.0
    %200 = vmatpush1.msra.mxu0 %v74
    %201 = vmatprep.subr.mxu0 0.0
    %202 = vmatpush1.msra.mxu0 %v75
    %203 = vmatprep.subr.mxu0 0.0
    %204 = vmatpush1.msra.mxu0 %v76
    %205 = vmatprep.subr.mxu0 0.0
    %206 = vmatpush1.msra.mxu0 %v77
    %207 = vmatprep.subr.mxu0 0.0
    %208 = vmatpush1.msra.mxu0 %v78
    %209 = vmatprep.subr.mxu0 0.0
    %210 = vmatpush1.msra.mxu0 %v79
    %211 = vmatprep.subr.mxu0 0.0
    %212 = vmatpush1.msra.mxu0 %v80
    %213 = vmatprep.subr.mxu0 0.0
    %214 = vmatpush1.msra.mxu0 %v81
    %215 = vmatprep.subr.mxu0 0.0
    %216 = vmatpush1.msra.mxu0 %v82
    %217 = vmatprep.subr.mxu0 0.0
    %218 = vmatpush1.msra.mxu0 %v83
    %219 = vmatprep.subr.mxu0 0.0
    %220 = vmatpush1.msra.mxu0 %v84
    %221 = vmatprep.subr.mxu0 0.0
    %222 = vmatpush1.msra.mxu0 %v85
    %223 = vmatprep.subr.mxu0 0.0
    %224 = vmatpush1.msra.mxu0 %v86
    %225 = vmatprep.subr.mxu0 0.0
    %226 = vmatpush1.msra.mxu0 %v87
    %227 = vmatprep.subr.mxu0 0.0
    %228 = vmatpush1.msra.mxu0 %v88
    %229 = vmatprep.subr.mxu0 0.0
    %230 = vmatpush1.msra.mxu0 %v89
    %231 = vmatprep.subr.mxu0 0.0
    %232 = vmatpush1.msra.mxu0 %v90
    %233 = vmatprep.subr.mxu0 0.0
    %234 = vmatpush1.msra.mxu0 %v91
    %235 = vmatprep.subr.mxu0 0.0
    %236 = vmatpush1.msra.mxu0 %v92
    %237 = vmatprep.subr.mxu0 0.0
    %238 = vmatpush1.msra.mxu0 %v93
    %239 = vmatprep.subr.mxu0 0.0
    %240 = vmatpush1.msra.mxu0 %v94
    %241 = vmatprep.mubr.f32.mxu0 %v26
    %242 = vmatmul.mubr.f32.gmra.mrb[0].mxu0 %v25
    %v243 = vpop.f32.mrb[0].mxu0
    %v244 = vadd.f32 %v169, %v243
    %v245 = vpop.f32.mrb[0].mxu0
    %246 = vmatprep.mubr.f32.mxu0 %v30
    %247 = vmatmul.mubr.f32.gmra.mrb[0].mxu0 %v29
    %v248 = vpop.f32.mrb[0].mxu0
    %v249 = vadd.f32 %v174, %v248
    %v250 = vpop.f32.mrb[0].mxu0
    %251 = vdwg.mxu0
    %v252 = vmax.f32 %v244, 0.0
    %v253 = vmax.f32 %v249, 0.0
    %v254 = vld [vmem:[%s3] sm:$0x1]
    %v256 = vlaneseq
    %v257 = vshrl.u32 %v256, 7
    %v258 = vsub.s32 0, %v257
    %v259 = vrot.slane %v254, %v258
    %v261 = vmul.f32 %v252, %v259
    %v262 = vmul.f32 %v253, %v259
    %vm263 = vcmask 523264
    %v264 = vsel %vm263, %v261, 0.0
    %265 = vadd.xlane.f32.xlu0 %v264
    %v266 = vpop.xlane.xlu0 %265
    %v267 = vsel %vm263, %v262, 0.0
    %268 = vadd.xlane.f32.xlu0 %v267
    %v269 = vpop.xlane.xlu0 %268
    %v270 = vld [vmem:[#allocation2] sm:$0x1]
    %v272 = vlaneseq
    %v273 = vshrl.u32 %v272, 7
    %v274 = vsub.s32 0, %v273
    %v275 = vrot.slane %v270, %v274
    %v277 = vadd.f32 %v266, %v275
    %v278 = vadd.f32 %v269, %v275
    %279 = vxpose.xlu0.b32.start [1/16] %v277, 128
    %280 = vxpose.xlu0.b32.cont [2/16] %v278, 128
    %281 = vxpose.xlu0.b32.cont [3/16] 0.0, 128
    %282 = vxpose.xlu0.b32.cont [4/16] 0.0, 128
    %283 = vxpose.xlu0.b32.cont [5/16] 0.0, 128
    %284 = vxpose.xlu0.b32.cont [6/16] 0.0, 128
    %285 = vxpose.xlu0.b32.cont [7/16] 0.0, 128
    %286 = vxpose.xlu0.b32.cont [8/16] 0.0, 128
    %287 = vxpose.xlu0.b32.cont [9/16] 0.0, 128
    %288 = vxpose.xlu0.b32.cont [10/16] 0.0, 128
    %289 = vxpose.xlu0.b32.cont [11/16] 0.0, 128
    %290 = vxpose.xlu0.b32.cont [12/16] 0.0, 128
    %291 = vxpose.xlu0.b32.cont [13/16] 0.0, 128
    %292 = vxpose.xlu0.b32.cont [14/16] 0.0, 128
    %293 = vxpose.xlu0.b32.cont [15/16] 0.0, 128
    %294 = vxpose.xlu0.b32.end [16/16] 0.0, 128
    %v295 = vpop.trf.xlu0
    %v296 = vpop.trf.xlu0
    %v297 = vpop.trf.xlu0
    %v298 = vpop.trf.xlu0
    %v299 = vpop.trf.xlu0
    %v300 = vpop.trf.xlu0
    %v301 = vpop.trf.xlu0
    %v302 = vpop.trf.xlu0
    %v303 = vpop.trf.xlu0
    %v304 = vpop.trf.xlu0
    %v305 = vpop.trf.xlu0
    %v306 = vpop.trf.xlu0
    %v307 = vpop.trf.xlu0
    %v308 = vpop.trf.xlu0
    %v309 = vpop.trf.xlu0
    %v310 = vpop.trf.xlu0
    %v311 = vxor.u32 %v295, 2147483648
    %v312 = vmul.f32 %v311, 1.442695
    %v313 = vpow.pop %v312
    %v314 = vadd.f32 %v313, 1.0
    %v315 = vrcp.pop %v314
    %v316 = vmul.f32 1.0, %v315
    %vm317 = vcmask 122880
    %318 = vst.msk [vmem:[#allocation3] sm:$0x1] %vm317, %v316
    // Predicated region
    $region22: #{tpu_custom_call.1} parent=1 // pred_check
      _
    $region23: #{tpu_custom_call.1} parent=1 // pred_check_branch
      %320 = sbr.rel (0) target = $region25
    $region24: #{tpu_custom_call.1} parent=1 // pred_region
      %s322 = ssub.s32 16, 16
      %323 = vsyncadd [#allocation4], %s322
      %s325 = sshll.u32 [#allocation3], 4
      %s326 = int_to_ptr.vmem [resolvable:$true] %s325
      %328 = dma.vmem_to_hbm [thread:$0]  %s326, 16, %s5, [#allocation4]
    $region25: #{tpu_custom_call.1} parent=1 // pred_fallthru
      _
    // Predicated region
    $region26: #{tpu_custom_call.1} parent=1 // pred_check
      _
    $region27: #{tpu_custom_call.1} parent=1 // pred_check_branch
      %330 = sbr.rel (0) target = $region29
    $region28: #{tpu_custom_call.1} parent=1 // pred_region
      %331 = dma.done [#allocation4], 16
    $region29: #{tpu_custom_call.1} parent=1 // pred_fallthru
      _
    %332 = vsyncpa [#allocation4], 1

</llo_original>
